<compile_context>
chip_gen: v6e
topology: v6e:2x2x1
jax: 0.10.0
libtpu: 0.0.40
codegen_flags: <defaults>
</compile_context>

<pallas_src>
import functools

import jax
import jax.numpy as jnp
from jax.experimental import pallas as pl
from jax.experimental.pallas import tpu as pltpu


def _round_up(x, m):
    return (x + m - 1) // m * m


def _pick_time_tiling(T):
    """Return (T_TILE, T_padded): T_TILE a multiple of 8 dividing T_padded."""
    t8 = _round_up(T, 8)
    for cand in (1024, 512, 256, 128, 64, 32, 16, 8):
        if t8 % cand == 0:
            return cand, t8
    return 8, t8  # unreachable: t8 is always a multiple of 8


def _pick_batch_tile(B, t_tile):
    """Pack a few batch rows per grid step (amortize per-step overhead)."""
    cap = min(8, max(1, 1024 // t_tile))
    best = 1
    for cand in range(1, min(B, cap) + 1):
        if B % cand == 0:
            best = cand
    return best


def _conv1d_relu_kernel(x_ref, xl_ref, xr_ref, w_ref, b_ref, o_ref,
                        *, b_tile, t_tile, ksize, pad):
    # x_ref : (B_TILE, T_TILE, C_in)   current time tile
    # xl_ref: (B_TILE, 8, C_in)        8 rows ending at the tile start (left halo)
    # xr_ref: (B_TILE, 8, C_in)        8 rows starting at the tile end (right halo)
    # w_ref : (K*C_in, C_out_p)        fused im2col weights (lane-padded C_out)
    # b_ref : (1, C_out_p)
    # o_ref : (B_TILE, T_TILE, C_out_p)
    t = pl.program_id(1)
    nt = pl.num_programs(1)
    has_left = t > 0
    has_right = t < nt - 1

    w = w_ref[...]                                   # native dtype -> MXU
    bias = b_ref[0, :].astype(jnp.float32)[None, :]  # f32 accumulate

    for bi in range(b_tile):  # static unroll over packed batch rows
        left = xl_ref[bi, 8 - pad:, :]               # (pad, C_in)
        left = jnp.where(has_left, left, jnp.zeros_like(left))
        right = xr_ref[bi, :pad, :]                  # (pad, C_in)
        right = jnp.where(has_right, right, jnp.zeros_like(right))

        # Haloed slab (T_TILE + K - 1, C_in); zero halo rows at the sequence
        # boundaries reproduce Conv1d's zero 'same' padding.
        slab = jnp.concatenate([left, x_ref[bi], right], axis=0)

        # im2col: lane-concatenate the K shifted views -> one MXU matmul with
        # contraction K*C_in instead of K tiny dots.
        cols = jnp.concatenate(
            [slab[k:k + t_tile, :] for k in range(ksize)], axis=-1)

        acc = jnp.dot(cols, w, preferred_element_type=jnp.float32) + bias
        o_ref[bi, :, :] = jnp.maximum(acc, 0.0).astype(o_ref.dtype)


def sequence_conv_wrapper(x, weight, bias):
    """Forward of SequenceConvWrapper(Conv1d(C_in,C_out,K,padding=(K-1)//2), ReLU(),
    batch_first=True).

    x:      (B, T, C_in)      batch_first sequence input
    weight: (C_out, C_in, K)  PyTorch Conv1d weight layout
    bias:   (C_out,)
    returns (B, T, C_out)
    """
    B, T, C_in = x.shape
    C_out, C_in_w, K = weight.shape
    assert C_in_w == C_in
    assert K % 2 == 1, "this wrapper instance uses a 'same' (odd-K) conv"
    pad = (K - 1) // 2
    assert pad <= 8, "halo blocks are 8 rows; kernel sizes up to 17 supported"

    # ---- tiling ----------------------------------------------------------
    t_tile, t_padded = _pick_time_tiling(T)
    if t_padded != T:
        # Zero rows beyond T behave exactly like the conv's zero padding; the
        # extra output rows are sliced off below.
        x = jnp.pad(x, ((0, 0), (0, t_padded - T), (0, 0)))
    nt = t_padded // t_tile
    b_tile = _pick_batch_tile(B, t_tile)
    nb = B // b_tile

    # Lane-dense output: pad C_out up to a multiple of 128 (unmasked vst).
    c_out_p = _round_up(C_out, 128)

    # Fused im2col weights: (C_out, C_in, K) -> (K*C_in, C_out_p).
    w = jnp.transpose(weight, (2, 1, 0)).reshape(K * C_in, C_out)
    b_vec = bias
    if c_out_p != C_out:
        w = jnp.pad(w, ((0, 0), (0, c_out_p - C_out)))
        b_vec = jnp.pad(bias, (0, c_out_p - C_out))
    b2d = b_vec.reshape(1, c_out_p)

    tpb = t_tile // 8        # 8-row blocks per time tile
    ntb = t_padded // 8      # total 8-row blocks along time

    kernel = functools.partial(
        _conv1d_relu_kernel, b_tile=b_tile, t_tile=t_tile, ksize=K, pad=pad)

    itemsize = jnp.dtype(x.dtype).itemsize
    cost = pl.CostEstimate(
        flops=2 * B * t_padded * K * C_in * c_out_p,
        transcendentals=0,
        bytes_accessed=(B * t_padded * (C_in + c_out_p)) * itemsize
        + (K * C_in * c_out_p + c_out_p) * jnp.dtype(w.dtype).itemsize,
    )

    out = pl.pallas_call(
        kernel,
        out_shape=jax.ShapeDtypeStruct((B, t_padded, c_out_p), x.dtype),
        grid_spec=pltpu.PrefetchScalarGridSpec(
            num_scalar_prefetch=0,
            grid=(nb, nt),
            in_specs=[
                # current tile
                pl.BlockSpec((b_tile, t_tile, C_in), lambda b, t: (b, t, 0)),
                # 8-row slab just before the tile (left halo source)
                pl.BlockSpec(
                    (b_tile, 8, C_in),
                    lambda b, t: (b, jnp.maximum(t * tpb - 1, 0), 0)),
                # 8-row slab just after the tile (right halo source)
                pl.BlockSpec(
                    (b_tile, 8, C_in),
                    lambda b, t: (b, jnp.minimum((t + 1) * tpb, ntb - 1), 0)),
                # fused weights + bias (constant blocks, stay VMEM-resident)
                pl.BlockSpec((K * C_in, c_out_p), lambda b, t: (0, 0)),
                pl.BlockSpec((1, c_out_p), lambda b, t: (0, 0)),
            ],
            out_specs=pl.BlockSpec((b_tile, t_tile, c_out_p),
                                   lambda b, t: (b, t, 0)),
        ),
        compiler_params=pltpu.CompilerParams(
            dimension_semantics=("parallel", "parallel")),
        cost_estimate=cost,
    )(x, x, x, w, b2d)

    if t_padded != T or c_out_p != C_out:
        out = out[:, :T, :C_out]
    return out


def _reference(x, weight, bias):
    # Pure-JAX reference of permute -> Conv1d('same') -> ReLU -> permute.
    B, T, C_in = x.shape
    C_out, _, K = weight.shape
    pad = (K - 1) // 2
    x_pad = jnp.pad(x, ((0, 0), (pad, pad), (0, 0)))
    out = jnp.zeros((B, T, C_out), jnp.float32) + bias[None, None, :]
    for k in range(K):
        out = out + jnp.einsum('btc,oc->bto',
                               x_pad[:, k:k + T, :], weight[:, :, k])
    return jnp.maximum(out, 0.0).astype(x.dtype)


if __name__ == "__main__":
    C_in, C_out, K = 4, 8, 3
    key = jax.random.PRNGKey(0)
    kx, kw, kb = jax.random.split(key, 3)

    bound = 1.0 / (C_in * K) ** 0.5
    weight = jax.random.uniform(kw, (C_out, C_in, K), jnp.float32, -bound, bound)
    bias = jax.random.uniform(kb, (C_out,), jnp.float32, -bound, bound)

    # Case 1: single time tile (B=2, T=16).
    x1 = jax.random.normal(kx, (2, 16, C_in), dtype=jnp.float32)
    out1 = jax.block_until_ready(sequence_conv_wrapper(x1, weight, bias))
    ref1 = _reference(x1, weight, bias)
    assert out1.shape == (2, 16, C_out)
    assert jnp.allclose(out1, ref1, atol=1e-4, rtol=1e-4)

    # Case 2: multiple time tiles (exercises the halo path: T=24 -> 3 tiles).
    x2 = jax.random.normal(jax.random.fold_in(kx, 1), (2, 24, C_in),
                           dtype=jnp.float32)
    out2 = jax.block_until_ready(sequence_conv_wrapper(x2, weight, bias))
    ref2 = _reference(x2, weight, bias)
    assert out2.shape == (2, 24, C_out)
    assert jnp.allclose(out2, ref2, atol=1e-4, rtol=1e-4)

    print("KERNEL_OK")
</pallas_src>

<mosaic_0001>
module attributes {stable_mosaic.version = 11 : i64} {
  func.func @_conv1d_relu_kernel(%arg0: i32, %arg1: i32, %arg2: memref<2x16x4xf32, #tpu.memory_space<vmem>>, %arg3: memref<2x8x4xf32, #tpu.memory_space<vmem>>, %arg4: memref<2x8x4xf32, #tpu.memory_space<vmem>>, %arg5: memref<12x128xf32, #tpu.memory_space<vmem>>, %arg6: memref<1x128xf32, #tpu.memory_space<vmem>>, %arg7: memref<2x16x128xf32, #tpu.memory_space<vmem>>) attributes {dimension_semantics = [#tpu.dimension_semantics<parallel>, #tpu.dimension_semantics<parallel>], iteration_bounds = array<i64: 1, 1>, scalar_prefetch = 0 : i64, scratch_operands = 0 : i64, tpu.core_type = #tpu.core_type<tc>, window_params = [{transform_indices = @transform_0, window_bounds = array<i64: 2, 16, 4>}, {transform_indices = @transform_1, window_bounds = array<i64: 2, 8, 4>}, {transform_indices = @transform_2, window_bounds = array<i64: 2, 8, 4>}, {pipeline_mode = #tpu.pipeline_mode<synchronous>, transform_indices = @transform_3, window_bounds = array<i64: 12, 128>}, {pipeline_mode = #tpu.pipeline_mode<synchronous>, transform_indices = @transform_4, window_bounds = array<i64: 1, 128>}, {transform_indices = @transform_5, window_bounds = array<i64: 2, 16, 128>}]} {
    %c0_i32 = arith.constant 0 : i32
    %0 = arith.cmpi sgt, %arg1, %c0_i32 : i32
    %c0_i32_0 = arith.constant 0 : i32
    %1 = arith.cmpi slt, %arg1, %c0_i32_0 : i32
    %c0 = arith.constant 0 : index
    %c0_1 = arith.constant 0 : index
    %2 = vector.load %arg5[%c0, %c0_1] : memref<12x128xf32, #tpu.memory_space<vmem>>, vector<12x128xf32>
    %c0_2 = arith.constant 0 : index
    %c0_3 = arith.constant 0 : index
    %3 = vector.load %arg6[%c0_2, %c0_3] : memref<1x128xf32, #tpu.memory_space<vmem>>, vector<1x128xf32>
    %4 = vector.shape_cast %3 : vector<1x128xf32> to vector<128xf32>
    %5 = vector.shape_cast %4 : vector<128xf32> to vector<1x128xf32>
    %c0_4 = arith.constant 0 : index
    %c7 = arith.constant 7 : index
    %c0_5 = arith.constant 0 : index
    %6 = vector.load %arg3[%c0_4, %c7, %c0_5] : memref<2x8x4xf32, #tpu.memory_space<vmem>>, vector<1x1x4xf32>
    %7 = vector.shape_cast %6 : vector<1x1x4xf32> to vector<1x4xf32>
    %cst = arith.constant 0.000000e+00 : f32
    %8 = vector.broadcast %cst : f32 to vector<1x4xf32>
    %9 = arith.select %0, %7, %8 : vector<1x4xf32>
    %c0_6 = arith.constant 0 : index
    %c0_7 = arith.constant 0 : index
    %c0_8 = arith.constant 0 : index
    %10 = vector.load %arg4[%c0_6, %c0_7, %c0_8] : memref<2x8x4xf32, #tpu.memory_space<vmem>>, vector<1x1x4xf32>
    %11 = vector.shape_cast %10 : vector<1x1x4xf32> to vector<1x4xf32>
    %cst_9 = arith.constant 0.000000e+00 : f32
    %12 = vector.broadcast %cst_9 : f32 to vector<1x4xf32>
    %13 = arith.select %1, %11, %12 : vector<1x4xf32>
    %c0_10 = arith.constant 0 : index
    %c0_11 = arith.constant 0 : index
    %c0_12 = arith.constant 0 : index
    %14 = vector.load %arg2[%c0_10, %c0_11, %c0_12] : memref<2x16x4xf32, #tpu.memory_space<vmem>>, vector<1x16x4xf32>
    %15 = vector.shape_cast %14 : vector<1x16x4xf32> to vector<16x4xf32>
    %16 = tpu.concatenate %9, %15, %13 in 0 : vector<1x4xf32>, vector<16x4xf32>, vector<1x4xf32> -> vector<18x4xf32>
    %17 = vector.extract_strided_slice %16 {offsets = [0, 0], sizes = [16, 4], strides = [1, 1]} : vector<18x4xf32> to vector<16x4xf32>
    %18 = vector.extract_strided_slice %16 {offsets = [1, 0], sizes = [16, 4], strides = [1, 1]} : vector<18x4xf32> to vector<16x4xf32>
    %19 = vector.extract_strided_slice %16 {offsets = [2, 0], sizes = [16, 4], strides = [1, 1]} : vector<18x4xf32> to vector<16x4xf32>
    %20 = tpu.concatenate %17, %18, %19 in 1 : vector<16x4xf32>, vector<16x4xf32>, vector<16x4xf32> -> vector<16x12xf32>
    %cst_13 = arith.constant dense<0.000000e+00> : vector<16x128xf32>
    %21 = tpu.matmul %20, %2, %cst_13 {dimension_numbers = #tpu.dot_dimension_numbers<[1], [0], [0], [1], [0, 0, 1, 1], [], []>} : vector<16x12xf32>, vector<12x128xf32>, vector<16x128xf32> -> vector<16x128xf32>
    %22 = vector.broadcast %5 : vector<1x128xf32> to vector<16x128xf32>
    %23 = arith.addf %21, %22 : vector<16x128xf32>
    %cst_14 = arith.constant 0.000000e+00 : f32
    %24 = vector.broadcast %cst_14 : f32 to vector<16x128xf32>
    %25 = arith.maximumf %23, %24 : vector<16x128xf32>
    %c0_15 = arith.constant 0 : index
    %c0_16 = arith.constant 0 : index
    %c0_17 = arith.constant 0 : index
    %26 = vector.load %arg7[%c0_15, %c0_16, %c0_17] : memref<2x16x128xf32, #tpu.memory_space<vmem>>, vector<1x16x128xf32>
    %27 = vector.shape_cast %26 : vector<1x16x128xf32> to vector<16x128xf32>
    %28 = vector.shape_cast %25 : vector<16x128xf32> to vector<1x16x128xf32>
    tpu.vector_store %arg7[%c0_15, %c0_16, %c0_17], %28 {strides = array<i32>} : memref<2x16x128xf32, #tpu.memory_space<vmem>>, vector<1x16x128xf32>,
    %c1 = arith.constant 1 : index
    %c7_18 = arith.constant 7 : index
    %c0_19 = arith.constant 0 : index
    %29 = vector.load %arg3[%c1, %c7_18, %c0_19] : memref<2x8x4xf32, #tpu.memory_space<vmem>>, vector<1x1x4xf32>
    %30 = vector.shape_cast %29 : vector<1x1x4xf32> to vector<1x4xf32>
    %cst_20 = arith.constant 0.000000e+00 : f32
    %31 = vector.broadcast %cst_20 : f32 to vector<1x4xf32>
    %32 = arith.select %0, %30, %31 : vector<1x4xf32>
    %c1_21 = arith.constant 1 : index
    %c0_22 = arith.constant 0 : index
    %c0_23 = arith.constant 0 : index
    %33 = vector.load %arg4[%c1_21, %c0_22, %c0_23] : memref<2x8x4xf32, #tpu.memory_space<vmem>>, vector<1x1x4xf32>
    %34 = vector.shape_cast %33 : vector<1x1x4xf32> to vector<1x4xf32>
    %cst_24 = arith.constant 0.000000e+00 : f32
    %35 = vector.broadcast %cst_24 : f32 to vector<1x4xf32>
    %36 = arith.select %1, %34, %35 : vector<1x4xf32>
    %c1_25 = arith.constant 1 : index
    %c0_26 = arith.constant 0 : index
    %c0_27 = arith.constant 0 : index
    %37 = vector.load %arg2[%c1_25, %c0_26, %c0_27] : memref<2x16x4xf32, #tpu.memory_space<vmem>>, vector<1x16x4xf32>
    %38 = vector.shape_cast %37 : vector<1x16x4xf32> to vector<16x4xf32>
    %39 = tpu.concatenate %32, %38, %36 in 0 : vector<1x4xf32>, vector<16x4xf32>, vector<1x4xf32> -> vector<18x4xf32>
    %40 = vector.extract_strided_slice %39 {offsets = [0, 0], sizes = [16, 4], strides = [1, 1]} : vector<18x4xf32> to vector<16x4xf32>
    %41 = vector.extract_strided_slice %39 {offsets = [1, 0], sizes = [16, 4], strides = [1, 1]} : vector<18x4xf32> to vector<16x4xf32>
    %42 = vector.extract_strided_slice %39 {offsets = [2, 0], sizes = [16, 4], strides = [1, 1]} : vector<18x4xf32> to vector<16x4xf32>
    %43 = tpu.concatenate %40, %41, %42 in 1 : vector<16x4xf32>, vector<16x4xf32>, vector<16x4xf32> -> vector<16x12xf32>
    %cst_28 = arith.constant dense<0.000000e+00> : vector<16x128xf32>
    %44 = tpu.matmul %43, %2, %cst_28 {dimension_numbers = #tpu.dot_dimension_numbers<[1], [0], [0], [1], [0, 0, 1, 1], [], []>} : vector<16x12xf32>, vector<12x128xf32>, vector<16x128xf32> -> vector<16x128xf32>
    %45 = vector.broadcast %5 : vector<1x128xf32> to vector<16x128xf32>
    %46 = arith.addf %44, %45 : vector<16x128xf32>
    %cst_29 = arith.constant 0.000000e+00 : f32
    %47 = vector.broadcast %cst_29 : f32 to vector<16x128xf32>
    %48 = arith.maximumf %46, %47 : vector<16x128xf32>
    %c1_30 = arith.constant 1 : index
    %c0_31 = arith.constant 0 : index
    %c0_32 = arith.constant 0 : index
    %49 = vector.load %arg7[%c1_30, %c0_31, %c0_32] : memref<2x16x128xf32, #tpu.memory_space<vmem>>, vector<1x16x128xf32>
    %50 = vector.shape_cast %49 : vector<1x16x128xf32> to vector<16x128xf32>
    %51 = vector.shape_cast %48 : vector<16x128xf32> to vector<1x16x128xf32>
    tpu.vector_store %arg7[%c1_30, %c0_31, %c0_32], %51 {strides = array<i32>} : memref<2x16x128xf32, #tpu.memory_space<vmem>>, vector<1x16x128xf32>,
    return
  }
  func.func @transform_0(%arg0: i32, %arg1: i32) -> (i32, i32, i32) {
    %c0_i32 = arith.constant 0 : i32
    %c0_i32_0 = arith.constant 0 : i32
    return %arg0, %arg1, %c0_i32 : i32, i32, i32
  }
  func.func @transform_1(%arg0: i32, %arg1: i32) -> (i32, i32, i32) {
    %c2_i32 = arith.constant 2 : i32
    %0 = arith.muli %arg1, %c2_i32 : i32
    %c1_i32 = arith.constant 1 : i32
    %1 = arith.subi %0, %c1_i32 : i32
    %c0_i32 = arith.constant 0 : i32
    %2 = arith.maxsi %1, %c0_i32 : i32
    %c0_i32_0 = arith.constant 0 : i32
    %c0_i32_1 = arith.constant 0 : i32
    return %arg0, %2, %c0_i32_0 : i32, i32, i32
  }
  func.func @transform_2(%arg0: i32, %arg1: i32) -> (i32, i32, i32) {
    %c1_i32 = arith.constant 1 : i32
    %0 = arith.addi %arg1, %c1_i32 : i32
    %c2_i32 = arith.constant 2 : i32
    %1 = arith.muli %0, %c2_i32 : i32
    %c1_i32_0 = arith.constant 1 : i32
    %2 = arith.minsi %1, %c1_i32_0 : i32
    %c0_i32 = arith.constant 0 : i32
    %c0_i32_1 = arith.constant 0 : i32
    return %arg0, %2, %c0_i32 : i32, i32, i32
  }
  func.func @transform_3(%arg0: i32, %arg1: i32) -> (i32, i32) {
    %c0_i32 = arith.constant 0 : i32
    %c0_i32_0 = arith.constant 0 : i32
    %c0_i32_1 = arith.constant 0 : i32
    return %c0_i32, %c0_i32_0 : i32, i32
  }
  func.func @transform_4(%arg0: i32, %arg1: i32) -> (i32, i32) {
    %c0_i32 = arith.constant 0 : i32
    %c0_i32_0 = arith.constant 0 : i32
    %c0_i32_1 = arith.constant 0 : i32
    return %c0_i32, %c0_i32_0 : i32, i32
  }
  func.func @transform_5(%arg0: i32, %arg1: i32) -> (i32, i32, i32) {
    %c0_i32 = arith.constant 0 : i32
    %c0_i32_0 = arith.constant 0 : i32
    return %arg0, %arg1, %c0_i32 : i32, i32, i32
  }
}

</mosaic_0001>

<llo_original>
// kernel: tpu_custom_call.1
$region0: #{tpu_custom_call.1}
  #allocation0 [shape = 'u32[]', space=smem, size = 0x4, offset = 0x4, fixed_abs, tag = 'smem constant byte address 0x4 - core index']
  #allocation1 [shape = 'u32[144,128]{1,0:T(1,128)}', space=vmem, size = 0x12000, scoped, tag = 'internal scratch']
  %s0 = inlined_call_operand.vmem [shape: f32[2,16,4], index: 0, kind: input, shape index: {}]
  %s1 = inlined_call_operand.vmem [shape: f32[2,16,4], index: 1, kind: input, shape index: {}]
  %s2 = inlined_call_operand.vmem [shape: f32[2,16,4], index: 2, kind: input, shape index: {}]
  %s3 = inlined_call_operand.vmem [shape: f32[12,128], index: 3, kind: input, shape index: {}]
  %s4 = inlined_call_operand.vmem [shape: f32[1,128], index: 4, kind: input, shape index: {}]
  %s5 = inlined_call_operand.hbm [shape: f32[2,16,128], index: 5, kind: output, shape index: {}]
  %s6 = sld [smem:[#allocation0]]
  $region106: #{tpu_custom_call.1} parent=0
    _
  %s8 = ssub.s32 1, %s6
  %s9 = scalar_select 0, %s8, %s6
  $region1: #{tpu_custom_call.1} parent=0
    #allocation2 [shape = 'u8[8192]{0}', space=vmem, size = 0x2000, scoped, tag = 'input window, operand 1, single buffered']
    #allocation3 [shape = 'u8[8192]{0}', space=vmem, size = 0x2000, scoped, tag = 'input window, operand 2, single buffered']
    #allocation4 [shape = 'u8[16384]{0}', space=vmem, size = 0x4000, scoped, tag = 'output window, operand 0, single buffered']
    #allocation5 [shape = 's32[1]{0}', space=sflag, size = 0x4, scoped, tag = 'scoped memory for tpu_custom_call.1']
    %10 = vsyncpa [#allocation5], 0
    // Predicated region
    $region2: #{tpu_custom_call.1} parent=1 // pred_check
      _
    $region3: #{tpu_custom_call.1} parent=1 // pred_check_branch
      %12 = sbr.rel (0) target = $region5
    $region4: #{tpu_custom_call.1} parent=1 // pred_region
      _
    $region5: #{tpu_custom_call.1} parent=1 // pred_fallthru
      _
    // Predicated region
    $region6: #{tpu_custom_call.1} parent=1 // pred_check
      _
    $region7: #{tpu_custom_call.1} parent=1 // pred_check_branch
      %14 = sbr.rel (0) target = $region9
    $region8: #{tpu_custom_call.1} parent=1 // pred_region
      %s15 = smul.u32 0, 2
      %s16 = ssub.s32 %s15, 1
      %p17 = scmp.gt.s32.totalorder %s16, 0
      %s18 = scalar_select %p17, %s16, 0
      %s19 = smul.addr %s18, 8
      %s20 = scalar_lea.vmem %s1, %s19
      // Predicated region
      $region10: #{tpu_custom_call.1} parent=8 // pred_check
        _
      $region11: #{tpu_custom_call.1} parent=8 // pred_check_branch
        %22 = sbr.rel (0) target = $region13
      $region12: #{tpu_custom_call.1} parent=8 // pred_region
        // Predicated region
        $region14: #{tpu_custom_call.1} parent=12 // pred_check
          _
        $region15: #{tpu_custom_call.1} parent=12 // pred_check_branch
          %24 = sbr.rel (0) target = $region17
        $region16: #{tpu_custom_call.1} parent=12 // pred_region
          // Predicated region
          $region29: #{tpu_custom_call.1} parent=16 // pred_check
            _
          $region30: #{tpu_custom_call.1} parent=16 // pred_check_branch
            %42 = sbr.rel (0) target = $region32
          $region31: #{tpu_custom_call.1} parent=16 // pred_region
            loop: start=0, step=1, limit=1
            $region33: #{tpu_custom_call.1} parent=31 // loop_pre_header
              _
            $region34: #{tpu_custom_call.1} parent=31 // loop_header
              %s44 = sphi 0, %s48
              %p45 = scmp.ge.s32.totalorder %s44, 1
              %s49 = sphi %s20, %s20
              %s50 = sphi [#allocation2], [#allocation2]
            $region35: #{tpu_custom_call.1} parent=31 // loop_header_branch
              %47 = sbr.rel (%p45) target = $region39
            $region36: #{tpu_custom_call.1} parent=31 // loop_body
              %v51 = vld [vmem:[%s49] sm:$0xff]
              %52 = vst [vmem:[%s50] sm:$0xff] %v51
              %v53 = vld [vmem:[%s49 + $0x10] sm:$0xff]
              %54 = vst [vmem:[%s50 + $0x8] sm:$0xff] %v53
            $region37: #{tpu_custom_call.1} parent=31 // loop_footer
              %s48 = sadd.s32 1, %s44
            $region38: #{tpu_custom_call.1} parent=31 // loop_footer_branch
              %43 = sbr.rel target = $region34
            $region39: #{tpu_custom_call.1} parent=31 // loop_exit
              _
          $region32: #{tpu_custom_call.1} parent=16 // pred_fallthru
            _
          // Predicated region
          $region40: #{tpu_custom_call.1} parent=16 // pred_check
            _
          $region41: #{tpu_custom_call.1} parent=16 // pred_check_branch
            %56 = sbr.rel target = $region43
          $region42: #{tpu_custom_call.1} parent=16 // pred_region
            _
          $region43: #{tpu_custom_call.1} parent=16 // pred_fallthru
            _
        $region17: #{tpu_custom_call.1} parent=12 // pred_fallthru
          _
        // Predicated region
        $region18: #{tpu_custom_call.1} parent=12 // pred_check
          _
        $region19: #{tpu_custom_call.1} parent=12 // pred_check_branch
          %26 = sbr.rel target = $region21
        $region20: #{tpu_custom_call.1} parent=12 // pred_region
          %s28 = ssub.s32 256, 1
          loop: start=0, step=1, limit=1
          $region22: #{tpu_custom_call.1} parent=20 // loop_pre_header
            _
          $region23: #{tpu_custom_call.1} parent=20 // loop_header
            %s30 = sphi 0, %s34
            %p31 = scmp.ge.s32.totalorder %s30, 1
            %s35 = sphi %s20, %s20
            %s36 = sphi [#allocation2], [#allocation2]
          $region24: #{tpu_custom_call.1} parent=20 // loop_header_branch
            %33 = sbr.rel (%p31) target = $region28
          $region25: #{tpu_custom_call.1} parent=20 // loop_body
            %v37 = vld [vmem:[%s35] sm:%s28]
            %38 = vst [vmem:[%s36] sm:%s28] %v37
            %v39 = vld [vmem:[%s35 + $0x10] sm:%s28]
            %40 = vst [vmem:[%s36 + $0x8] sm:%s28] %v39
          $region26: #{tpu_custom_call.1} parent=20 // loop_footer
            %s34 = sadd.s32 1, %s30
          $region27: #{tpu_custom_call.1} parent=20 // loop_footer_branch
            %29 = sbr.rel target = $region23
          $region28: #{tpu_custom_call.1} parent=20 // loop_exit
            _
        $region21: #{tpu_custom_call.1} parent=12 // pred_fallthru
          _
      $region13: #{tpu_custom_call.1} parent=8 // pred_fallthru
        _
      %57 = vnop
    $region9: #{tpu_custom_call.1} parent=1 // pred_fallthru
      _
    // Predicated region
    $region44: #{tpu_custom_call.1} parent=1 // pred_check
      _
    $region45: #{tpu_custom_call.1} parent=1 // pred_check_branch
      %59 = sbr.rel (0) target = $region47
    $region46: #{tpu_custom_call.1} parent=1 // pred_region
      %s60 = sadd.s32 0, 1
      %s61 = smul.u32 %s60, 2
      %p62 = scmp.lt.s32.totalorder %s61, 1
      %s63 = scalar_select %p62, %s61, 1
      %s64 = smul.addr %s63, 8
      %s65 = scalar_lea.vmem %s2, %s64
      // Predicated region
      $region48: #{tpu_custom_call.1} parent=46 // pred_check
        _
      $region49: #{tpu_custom_call.1} parent=46 // pred_check_branch
        %67 = sbr.rel (0) target = $region51
      $region50: #{tpu_custom_call.1} parent=46 // pred_region
        // Predicated region
        $region52: #{tpu_custom_call.1} parent=50 // pred_check
          _
        $region53: #{tpu_custom_call.1} parent=50 // pred_check_branch
          %69 = sbr.rel (0) target = $region55
        $region54: #{tpu_custom_call.1} parent=50 // pred_region
          // Predicated region
          $region67: #{tpu_custom_call.1} parent=54 // pred_check
            _
          $region68: #{tpu_custom_call.1} parent=54 // pred_check_branch
            %87 = sbr.rel (0) target = $region70
          $region69: #{tpu_custom_call.1} parent=54 // pred_region
            loop: start=0, step=1, limit=1
            $region71: #{tpu_custom_call.1} parent=69 // loop_pre_header
              _
            $region72: #{tpu_custom_call.1} parent=69 // loop_header
              %s89 = sphi 0, %s93
              %p90 = scmp.ge.s32.totalorder %s89, 1
              %s94 = sphi %s65, %s65
              %s95 = sphi [#allocation3], [#allocation3]
            $region73: #{tpu_custom_call.1} parent=69 // loop_header_branch
              %92 = sbr.rel (%p90) target = $region77
            $region74: #{tpu_custom_call.1} parent=69 // loop_body
              %v96 = vld [vmem:[%s94] sm:$0xff]
              %97 = vst [vmem:[%s95] sm:$0xff] %v96
              %v98 = vld [vmem:[%s94 + $0x10] sm:$0xff]
              %99 = vst [vmem:[%s95 + $0x8] sm:$0xff] %v98
            $region75: #{tpu_custom_call.1} parent=69 // loop_footer
              %s93 = sadd.s32 1, %s89
            $region76: #{tpu_custom_call.1} parent=69 // loop_footer_branch
              %88 = sbr.rel target = $region72
            $region77: #{tpu_custom_call.1} parent=69 // loop_exit
              _
          $region70: #{tpu_custom_call.1} parent=54 // pred_fallthru
            _
          // Predicated region
          $region78: #{tpu_custom_call.1} parent=54 // pred_check
            _
          $region79: #{tpu_custom_call.1} parent=54 // pred_check_branch
            %101 = sbr.rel target = $region81
          $region80: #{tpu_custom_call.1} parent=54 // pred_region
            _
          $region81: #{tpu_custom_call.1} parent=54 // pred_fallthru
            _
        $region55: #{tpu_custom_call.1} parent=50 // pred_fallthru
          _
        // Predicated region
        $region56: #{tpu_custom_call.1} parent=50 // pred_check
          _
        $region57: #{tpu_custom_call.1} parent=50 // pred_check_branch
          %71 = sbr.rel target = $region59
        $region58: #{tpu_custom_call.1} parent=50 // pred_region
          %s73 = ssub.s32 256, 1
          loop: start=0, step=1, limit=1
          $region60: #{tpu_custom_call.1} parent=58 // loop_pre_header
            _
          $region61: #{tpu_custom_call.1} parent=58 // loop_header
            %s75 = sphi 0, %s79
            %p76 = scmp.ge.s32.totalorder %s75, 1
            %s80 = sphi %s65, %s65
            %s81 = sphi [#allocation3], [#allocation3]
          $region62: #{tpu_custom_call.1} parent=58 // loop_header_branch
            %78 = sbr.rel (%p76) target = $region66
          $region63: #{tpu_custom_call.1} parent=58 // loop_body
            %v82 = vld [vmem:[%s80] sm:%s73]
            %83 = vst [vmem:[%s81] sm:%s73] %v82
            %v84 = vld [vmem:[%s80 + $0x10] sm:%s73]
            %85 = vst [vmem:[%s81 + $0x8] sm:%s73] %v84
          $region64: #{tpu_custom_call.1} parent=58 // loop_footer
            %s79 = sadd.s32 1, %s75
          $region65: #{tpu_custom_call.1} parent=58 // loop_footer_branch
            %74 = sbr.rel target = $region61
          $region66: #{tpu_custom_call.1} parent=58 // loop_exit
            _
        $region59: #{tpu_custom_call.1} parent=50 // pred_fallthru
          _
      $region51: #{tpu_custom_call.1} parent=46 // pred_fallthru
        _
      %102 = vnop
    $region47: #{tpu_custom_call.1} parent=1 // pred_fallthru
      _
    // Predicated region
    $region82: #{tpu_custom_call.1} parent=1 // pred_check
      _
    $region83: #{tpu_custom_call.1} parent=1 // pred_check_branch
      %104 = sbr.rel (0) target = $region85
    $region84: #{tpu_custom_call.1} parent=1 // pred_region
      _
    $region85: #{tpu_custom_call.1} parent=1 // pred_fallthru
      _
    // Predicated region
    $region86: #{tpu_custom_call.1} parent=1 // pred_check
      _
    $region87: #{tpu_custom_call.1} parent=1 // pred_check_branch
      %106 = sbr.rel (0) target = $region89
    $region88: #{tpu_custom_call.1} parent=1 // pred_region
      _
    $region89: #{tpu_custom_call.1} parent=1 // pred_fallthru
      _
    // Predicated region
    $region90: #{tpu_custom_call.1} parent=1 // pred_check
      _
    $region91: #{tpu_custom_call.1} parent=1 // pred_check_branch
      %108 = sbr.rel (0) target = $region93
    $region92: #{tpu_custom_call.1} parent=1 // pred_region
      _
    $region93: #{tpu_custom_call.1} parent=1 // pred_fallthru
      _
    // Predicated region
    $region94: #{tpu_custom_call.1} parent=1 // pred_check
      _
    $region95: #{tpu_custom_call.1} parent=1 // pred_check_branch
      %110 = sbr.rel (0) target = $region97
    $region96: #{tpu_custom_call.1} parent=1 // pred_region
      _
    $region97: #{tpu_custom_call.1} parent=1 // pred_fallthru
      _
    %s111 = smul.u32 0, 2
    %s112 = ssub.s32 %s111, 1
    %p113 = scmp.gt.s32.totalorder %s112, 0
    %s114 = scalar_select %p113, %s112, 0
    %s115 = sadd.s32 0, 1
    %s116 = smul.u32 %s115, 2
    %p117 = scmp.lt.s32.totalorder %s116, 1
    %s118 = scalar_select %p117, %s116, 1
    %p119 = scmp.gt.s32.totalorder 0, 0
    %p120 = scmp.lt.s32.totalorder 0, 0
    %v121 = vld [vmem:[%s3] sm:$0xff]
    %v122 = vld [vmem:[%s3 + $0x8] sm:$0xf]
    %v123 = vld [vmem:[%s4] sm:$0x1]
    %v124 = vld [vmem:[#allocation2 + $0x7] sm:$0x1]
    %s125 = scalar_select %p119, 1, 0
    %v126 = vstv %s125
    %vm127 = vcmp.eq.s32.totalorder %v126, 1
    %v128 = vsel %vm127, %v124, 0.0
    %v129 = vld [vmem:[#allocation3] sm:$0x1]
    %s130 = scalar_select %p120, 1, 0
    %v131 = vstv %s130
    %vm132 = vcmp.eq.s32.totalorder %v131, 1
    %v133 = vsel %vm132, %v129, 0.0
    %v134 = vld [vmem:[%s0] sm:$0xff]
    %v135 = vld [vmem:[%s0 + $0x8] sm:$0xff]
    %vm138 = vcmask 1040384
    %v139 = vrot.slane %v134, 7
    %v140 = vrot.slane %v135, 7
    %v141 = vsel %vm138, %v139, %v140
    %v146 = vrot.slane %v133, 7
    %v148 = vsel %vm138, %v128, %v139
    %v149 = vsel %vm138, %v140, %v146
    %vm152 = vcmask 1046528
    %v153 = vrot.slane %v148, 1
    %v154 = vrot.slane %v141, 1
    %v155 = vsel %vm152, %v153, %v154
    %v156 = vrot.slane %v149, 1
    %v157 = vsel %vm152, %v154, %v156
    %158 = vrot.lane.b32.xlu0 %v155, 4
    %v159 = vpop.permute.xlu0 %158
    %160 = vrot.lane.b32.xlu0 %v157, 4
    %v161 = vpop.permute.xlu0 %160
    %vm164 = vcmask 1045504
    %v165 = vrot.slane %v148, 2
    %v166 = vrot.slane %v141, 2
    %v167 = vsel %vm164, %v165, %v166
    %v168 = vrot.slane %v149, 2
    %v169 = vsel %vm164, %v166, %v168
    %170 = vrot.lane.b32.xlu0 %v167, 8
    %v171 = vpop.permute.xlu0 %170
    %172 = vrot.lane.b32.xlu0 %v169, 8
    %v173 = vpop.permute.xlu0 %172
    %vm176 = vcmask 31744
    %v177 = vsel %vm176, %v148, %v159
    %v178 = vsel %vm176, %v141, %v161
    %vm179 = vcmask 64512
    %v180 = vsel %vm179, %v177, %v171
    %v181 = vsel %vm179, %v178, %v173
    %v183 = vlaneseq
    %v184 = vshrl.u32 %v183, 7
    %v185 = vsub.s32 0, %v184
    %v186 = vrot.slane %v123, %v185
    %vm188 = vcmask 97280
    %v190 = vsel %vm188, %v180, 0
    %v193 = vsel %vm188, %v181, 0
    %vm195 = vcmask 1043456
    %v197 = vsel %vm195, %v122, 0
    %199 = vmatprep.subr.mxu0 0.0
    %200 = vmatpush1.msra.mxu0 0.0
    %201 = vmatprep.subr.mxu0 0.0
    %202 = vmatpush1.msra.mxu0 0.0
    %203 = vmatprep.subr.mxu0 0.0
    %204 = vmatpush1.msra.mxu0 0.0
    %205 = vmatprep.subr.mxu0 0.0
    %206 = vmatpush1.msra.mxu0 0.0
    %207 = vmatprep.subr.mxu0 0.0
    %208 = vmatpush1.msra.mxu0 0.0
    %209 = vmatprep.subr.mxu0 0.0
    %210 = vmatpush1.msra.mxu0 0.0
    %211 = vmatprep.subr.mxu0 0.0
    %212 = vmatpush1.msra.mxu0 0.0
    %213 = vmatprep.subr.mxu0 0.0
    %214 = vmatpush1.msra.mxu0 0.0
    %215 = vmatprep.subr.mxu0 0.0
    %216 = vmatpush1.msra.mxu0 0.0
    %217 = vmatprep.subr.mxu0 0.0
    %218 = vmatpush1.msra.mxu0 0.0
    %219 = vmatprep.subr.mxu0 0.0
    %220 = vmatpush1.msra.mxu0 0.0
    %221 = vmatprep.subr.mxu0 0.0
    %222 = vmatpush1.msra.mxu0 0.0
    %223 = vmatprep.subr.mxu0 0.0
    %224 = vmatpush1.msra.mxu0 0.0
    %225 = vmatprep.subr.mxu0 0.0
    %226 = vmatpush1.msra.mxu0 0.0
    %227 = vmatprep.subr.mxu0 0.0
    %228 = vmatpush1.msra.mxu0 %v197
    %229 = vmatprep.subr.mxu0 0.0
    %230 = vmatpush1.msra.mxu0 %v121
    %231 = vmatprep.subr.mxu0 0.0
    %232 = vmatpush2.msra.mxu0 0.0
    %233 = vmatprep.subr.mxu0 0.0
    %234 = vmatpush2.msra.mxu0 0.0
    %235 = vmatprep.subr.mxu0 0.0
    %236 = vmatpush2.msra.mxu0 0.0
    %237 = vmatprep.subr.mxu0 0.0
    %238 = vmatpush2.msra.mxu0 0.0
    %239 = vmatprep.subr.mxu0 0.0
    %240 = vmatpush2.msra.mxu0 0.0
    %241 = vmatprep.subr.mxu0 0.0
    %242 = vmatpush2.msra.mxu0 0.0
    %243 = vmatprep.subr.mxu0 0.0
    %244 = vmatpush2.msra.mxu0 0.0
    %245 = vmatprep.subr.mxu0 0.0
    %246 = vmatpush2.msra.mxu0 0.0
    %247 = vmatprep.subr.mxu0 0.0
    %248 = vmatpush2.msra.mxu0 0.0
    %249 = vmatprep.subr.mxu0 0.0
    %250 = vmatpush2.msra.mxu0 0.0
    %251 = vmatprep.subr.mxu0 0.0
    %252 = vmatpush2.msra.mxu0 0.0
    %253 = vmatprep.subr.mxu0 0.0
    %254 = vmatpush2.msra.mxu0 0.0
    %255 = vmatprep.subr.mxu0 0.0
    %256 = vmatpush2.msra.mxu0 0.0
    %257 = vmatprep.subr.mxu0 0.0
    %258 = vmatpush2.msra.mxu0 0.0
    %259 = vmatprep.subr.mxu0 0.0
    %260 = vmatpush2.msra.mxu0 0.0
    %261 = vmatprep.subr.mxu0 0.0
    %262 = vmatpush2.msra.mxu0 0.0
    %263 = vmatprep.mubr.f32.mxu0 0.0
    %264 = vmatmul.mubr.f32.gmra.mxu0 %v190
    %v265 = vpop.f32.mrf.mxu0
    %v266 = vadd.f32 %v186, %v265
    %v267 = vpop.f32.mrf.mxu0
    %268 = vmatprep.mubr.f32.mxu0 0.0
    %269 = vmatmul.mubr.f32.gmra.mxu0 %v193
    %v270 = vpop.f32.mrf.mxu0
    %v271 = vadd.f32 %v186, %v270
    %v272 = vpop.f32.mrf.mxu0
    %273 = vdwg.mxu0
    %v274 = vmax.f32 %v266, 0.0
    %v275 = vmax.f32 %v271, 0.0
    %276 = vst [vmem:[#allocation4] sm:$0xff] %v274
    %277 = vst [vmem:[#allocation4 + $0x8] sm:$0xff] %v275
    %s278 = scalar_lea.vmem [#allocation2], 8
    %v279 = vld [vmem:[%s278 + $0x7] sm:$0x1]
    %v280 = vsel %vm127, %v279, 0.0
    %s281 = scalar_lea.vmem [#allocation3], 8
    %v282 = vld [vmem:[%s281] sm:$0x1]
    %v283 = vsel %vm132, %v282, 0.0
    %s284 = scalar_lea.vmem %s0, 16
    %v285 = vld [vmem:[%s284] sm:$0xff]
    %v286 = vld [vmem:[%s284 + $0x8] sm:$0xff]
    %v289 = vrot.slane %v285, 7
    %v290 = vrot.slane %v286, 7
    %v291 = vsel %vm138, %v289, %v290
    %v296 = vrot.slane %v283, 7
    %v298 = vsel %vm138, %v280, %v289
    %v299 = vsel %vm138, %v290, %v296
    %v302 = vrot.slane %v298, 1
    %v303 = vrot.slane %v291, 1
    %v304 = vsel %vm152, %v302, %v303
    %v305 = vrot.slane %v299, 1
    %v306 = vsel %vm152, %v303, %v305
    %307 = vrot.lane.b32.xlu0 %v304, 4
    %v308 = vpop.permute.xlu0 %307
    %309 = vrot.lane.b32.xlu0 %v306, 4
    %v310 = vpop.permute.xlu0 %309
    %v313 = vrot.slane %v298, 2
    %v314 = vrot.slane %v291, 2
    %v315 = vsel %vm164, %v313, %v314
    %v316 = vrot.slane %v299, 2
    %v317 = vsel %vm164, %v314, %v316
    %318 = vrot.lane.b32.xlu0 %v315, 8
    %v319 = vpop.permute.xlu0 %318
    %320 = vrot.lane.b32.xlu0 %v317, 8
    %v321 = vpop.permute.xlu0 %320
    %v324 = vsel %vm176, %v298, %v308
    %v325 = vsel %vm176, %v291, %v310
    %v326 = vsel %vm179, %v324, %v319
    %v327 = vsel %vm179, %v325, %v321
    %v329 = vsel %vm188, %v326, 0
    %v332 = vsel %vm188, %v327, 0
    %334 = vmatprep.subr.mxu0 0.0
    %335 = vmatpush1.msra.mxu0 0.0
    %336 = vmatprep.subr.mxu0 0.0
    %337 = vmatpush1.msra.mxu0 0.0
    %338 = vmatprep.subr.mxu0 0.0
    %339 = vmatpush1.msra.mxu0 0.0
    %340 = vmatprep.subr.mxu0 0.0
    %341 = vmatpush1.msra.mxu0 0.0
    %342 = vmatprep.subr.mxu0 0.0
    %343 = vmatpush1.msra.mxu0 0.0
    %344 = vmatprep.subr.mxu0 0.0
    %345 = vmatpush1.msra.mxu0 0.0
    %346 = vmatprep.subr.mxu0 0.0
    %347 = vmatpush1.msra.mxu0 0.0
    %348 = vmatprep.subr.mxu0 0.0
    %349 = vmatpush1.msra.mxu0 0.0
    %350 = vmatprep.subr.mxu0 0.0
    %351 = vmatpush1.msra.mxu0 0.0
    %352 = vmatprep.subr.mxu0 0.0
    %353 = vmatpush1.msra.mxu0 0.0
    %354 = vmatprep.subr.mxu0 0.0
    %355 = vmatpush1.msra.mxu0 0.0
    %356 = vmatprep.subr.mxu0 0.0
    %357 = vmatpush1.msra.mxu0 0.0
    %358 = vmatprep.subr.mxu0 0.0
    %359 = vmatpush1.msra.mxu0 0.0
    %360 = vmatprep.subr.mxu0 0.0
    %361 = vmatpush1.msra.mxu0 0.0
    %362 = vmatprep.subr.mxu0 0.0
    %363 = vmatpush1.msra.mxu0 %v197
    %364 = vmatprep.subr.mxu0 0.0
    %365 = vmatpush1.msra.mxu0 %v121
    %366 = vmatprep.subr.mxu0 0.0
    %367 = vmatpush2.msra.mxu0 0.0
    %368 = vmatprep.subr.mxu0 0.0
    %369 = vmatpush2.msra.mxu0 0.0
    %370 = vmatprep.subr.mxu0 0.0
    %371 = vmatpush2.msra.mxu0 0.0
    %372 = vmatprep.subr.mxu0 0.0
    %373 = vmatpush2.msra.mxu0 0.0
    %374 = vmatprep.subr.mxu0 0.0
    %375 = vmatpush2.msra.mxu0 0.0
    %376 = vmatprep.subr.mxu0 0.0
    %377 = vmatpush2.msra.mxu0 0.0
    %378 = vmatprep.subr.mxu0 0.0
    %379 = vmatpush2.msra.mxu0 0.0
    %380 = vmatprep.subr.mxu0 0.0
    %381 = vmatpush2.msra.mxu0 0.0
    %382 = vmatprep.subr.mxu0 0.0
    %383 = vmatpush2.msra.mxu0 0.0
    %384 = vmatprep.subr.mxu0 0.0
    %385 = vmatpush2.msra.mxu0 0.0
    %386 = vmatprep.subr.mxu0 0.0
    %387 = vmatpush2.msra.mxu0 0.0
    %388 = vmatprep.subr.mxu0 0.0
    %389 = vmatpush2.msra.mxu0 0.0
    %390 = vmatprep.subr.mxu0 0.0
    %391 = vmatpush2.msra.mxu0 0.0
    %392 = vmatprep.subr.mxu0 0.0
    %393 = vmatpush2.msra.mxu0 0.0
    %394 = vmatprep.subr.mxu0 0.0
    %395 = vmatpush2.msra.mxu0 0.0
    %396 = vmatprep.subr.mxu0 0.0
    %397 = vmatpush2.msra.mxu0 0.0
    %398 = vmatprep.mubr.f32.mxu0 0.0
    %399 = vmatmul.mubr.f32.gmra.mxu0 %v329
    %v400 = vpop.f32.mrf.mxu0
    %v401 = vadd.f32 %v186, %v400
    %v402 = vpop.f32.mrf.mxu0
    %403 = vmatprep.mubr.f32.mxu0 0.0
    %404 = vmatmul.mubr.f32.gmra.mxu0 %v332
    %v405 = vpop.f32.mrf.mxu0
    %v406 = vadd.f32 %v186, %v405
    %v407 = vpop.f32.mrf.mxu0
    %408 = vdwg.mxu0
    %v409 = vmax.f32 %v401, 0.0
    %v410 = vmax.f32 %v406, 0.0
    %s411 = scalar_lea.vmem [#allocation4], 16
    %412 = vst [vmem:[%s411] sm:$0xff] %v409
    %413 = vst [vmem:[%s411 + $0x8] sm:$0xff] %v410
    // Predicated region
    $region98: #{tpu_custom_call.1} parent=1 // pred_check
      _
    $region99: #{tpu_custom_call.1} parent=1 // pred_check_branch
      %415 = sbr.rel (0) target = $region101
    $region100: #{tpu_custom_call.1} parent=1 // pred_region
      %s417 = ssub.s32 512, 512
      %418 = vsyncadd [#allocation5], %s417
      %s419 = sshll.u32 [#allocation4], 4
      %s420 = int_to_ptr.vmem [resolvable:$true] %s419
      %425 = dma.vmem_to_hbm [thread:$0]  %s420, 512, %s5, [#allocation5], 128, 128, 8
    $region101: #{tpu_custom_call.1} parent=1 // pred_fallthru
      _
    // Predicated region
    $region102: #{tpu_custom_call.1} parent=1 // pred_check
      _
    $region103: #{tpu_custom_call.1} parent=1 // pred_check_branch
      %427 = sbr.rel (0) target = $region105
    $region104: #{tpu_custom_call.1} parent=1 // pred_region
      %428 = dma.done [#allocation5], 512
    $region105: #{tpu_custom_call.1} parent=1 // pred_fallthru
      _
    %429 = vsyncpa [#allocation5], 1

</llo_original>
